<compile_context>
chip_gen: v5e
topology: v5e:2x2
jax: 0.10.0
libtpu: 0.0.40
codegen_flags: <defaults>
</compile_context>

<pallas_src>
import warnings

import numpy as np
import jax
import jax.numpy as jnp
from jax.experimental import pallas as pl
from jax.experimental.pallas import tpu as pltpu  # noqa: F401  (TPU backend extensions)


def _identity_kernel(x_hbm_ref, o_hbm_ref):
    # Output aliases the input buffer: the data is already exactly where the
    # result must live.  Nothing to compute, nothing to move.
    del x_hbm_ref, o_hbm_ref


def identity(x: jax.Array) -> jax.Array:
    """Identity forward pass as a zero-data-movement Pallas TPU kernel.

    For true zero-copy semantics call under jit with the input donated:
        y = jax.jit(identity, donate_argnums=0)(x)
    so the output alias is honored; a non-donated/eager call pays at most one
    defensive HBM copy inserted by XLA.
    """
    return pl.pallas_call(
        _identity_kernel,
        out_shape=jax.ShapeDtypeStruct(x.shape, x.dtype),
        in_specs=[pl.BlockSpec(memory_space=pl.ANY)],   # raw HBM ref, no auto-DMA
        out_specs=pl.BlockSpec(memory_space=pl.ANY),    # raw HBM ref, no auto-DMA
        input_output_aliases={0: 0},                    # output shares the input buffer
        cost_estimate=pl.CostEstimate(flops=0, transcendentals=0, bytes_accessed=0),
    )(x)


if __name__ == "__main__":
    key = jax.random.PRNGKey(0)
    # Module forward is shape-agnostic; use an NCHW-like input.
    x = jax.random.normal(key, (2, 4, 16, 16), dtype=jnp.float32)
    x_host = np.asarray(x)  # host snapshot BEFORE the device buffer is donated

    identity_jit = jax.jit(identity, donate_argnums=0)
    with warnings.catch_warnings():
        # Donation emits a harmless warning on backends/modes that don't
        # support it (e.g. interpret-mode runs); keep the run output clean.
        warnings.simplefilter("ignore")
        y = identity_jit(x)
    jax.block_until_ready(y)

    assert y.shape == x_host.shape and y.dtype == x_host.dtype
    assert np.array_equal(np.asarray(y), x_host)
    print("KERNEL_OK")
</pallas_src>

<mosaic_0001>
module attributes {stable_mosaic.version = 11 : i64} {
  func.func @_identity_kernel(%arg0: memref<2x4x16x16xf32, #tpu.memory_space<any>>, %arg1: memref<2x4x16x16xf32, #tpu.memory_space<any>>) attributes {dimension_semantics = [], scalar_prefetch = 0 : i64, scratch_operands = 0 : i64, tpu.core_type = #tpu.core_type<tc>} {
    return
  }
}

</mosaic_0001>

<llo_original>
// kernel: identity.1
$region0: #{identity.1}
  #allocation0 [shape = 'u32[]', space=smem, size = 0x4, offset = 0x4, fixed_abs, tag = 'smem constant byte address 0x4 - core index']
  #allocation1 [shape = 'u32[72,128]{1,0:T(1,128)}', space=vmem, size = 0x9000, scoped, tag = 'internal scratch']
  %s0 = inlined_call_operand.hbm [shape: f32[2,4,16,16], index: 0, kind: input, shape index: {}, may-alias: {0,1}]
  %s1 = inlined_call_operand.hbm [shape: f32[2,4,16,16], index: 1, kind: output, shape index: {}, may-alias: {0,1}]
  %s2 = sld [smem:[#allocation0]]
  $region2: #{identity.1} parent=0
    _
  %s4 = ssub.s32 1, %s2
  %s5 = scalar_select 0, %s4, %s2

</llo_original>
